<compile_context>
chip_gen: v7x
topology: tpu7x:2x2x1
jax: 0.10.0
libtpu: 0.0.40
codegen_flags: <defaults>
</compile_context>

<pallas_src>
import jax
import jax.numpy as jnp
from jax.experimental import pallas as pl
from jax.experimental.pallas import tpu as pltpu


def _round_up(n, m):
    return ((n + m - 1) // m) * m


# ---------------------------------------------------------------------------
# Kernel
# ---------------------------------------------------------------------------
def qvalue_kernel(x_ref, w1_ref, b1_ref, w2_ref, b2_ref, o_ref):
    # fc1 + ReLU: MXU matmul (f32 accumulate) + whole-tile VPU add/max.
    h = jnp.dot(x_ref[...], w1_ref[...], preferred_element_type=jnp.float32)
    h = jnp.maximum(h + b1_ref[...], 0.0)
    # fc2 (if weights were bf16, h is rounded to the weight dtype for the MXU;
    # accumulation stays f32 via preferred_element_type).
    out = jnp.dot(h.astype(w2_ref.dtype), w2_ref[...],
                  preferred_element_type=jnp.float32)
    o_ref[...] = (out + b2_ref[...]).astype(o_ref.dtype)


# ---------------------------------------------------------------------------
# One-time parameter preparation (hoisted out of the forward path)
# ---------------------------------------------------------------------------
def pad_params(w1, b1, w2, b2):
    """Pad parameters once to TPU-friendly shapes.

    w1: (state_dim, hidden), b1: (1, hidden) or (hidden,),
    w2: (hidden, action_dim), b2: (1, action_dim) or (action_dim,).
    The state_dim (K of fc1) is deliberately NOT padded.  hidden is padded to
    a lane multiple (256 when >=128 to match the 256-wide MXU, else 128) and
    action_dim to 128 so output stores are lane-dense.  Zero padding keeps the
    math exact (padded hidden columns produce relu(0)=0 -> no fc2 contribution;
    padded action columns are sliced off by the wrapper)."""
    b1 = jnp.reshape(b1, (1, -1))
    b2 = jnp.reshape(b2, (1, -1))
    state_dim, hidden_dim = w1.shape
    action_dim = w2.shape[1]

    H_p = _round_up(hidden_dim, 256 if hidden_dim >= 128 else 128)
    A_p = _round_up(action_dim, 128)

    w1_p = jnp.zeros((state_dim, H_p), w1.dtype).at[:, :hidden_dim].set(w1)
    b1_p = jnp.zeros((1, H_p), b1.dtype).at[:, :hidden_dim].set(b1)
    w2_p = jnp.zeros((H_p, A_p), w2.dtype).at[:hidden_dim, :action_dim].set(w2)
    b2_p = jnp.zeros((1, A_p), b2.dtype).at[:, :action_dim].set(b2)
    return w1_p, b1_p, w2_p, b2_p


def _pick_batch_tiles(batch, max_block_batch=2048):
    """Batch tile size per generation.

    v7x has 2 TensorCores/chip: we want >=2 'parallel' grid steps so both get
    work.  v5e/v6e are single-TC: every extra grid step is pure serial
    overhead (~0.35 us), so keep the whole batch in one step when it fits."""
    B_sub = _round_up(batch, 8)  # sublane alignment
    try:
        kind = jax.devices()[0].device_kind.lower()
    except Exception:  # pragma: no cover
        kind = ""
    want_blocks = 2 if ("v7" in kind and B_sub >= 16) else 1
    TB = min(_round_up(pl.cdiv(B_sub, want_blocks), 8), max_block_batch)
    B_p = _round_up(B_sub, TB)
    return B_p, TB


# ---------------------------------------------------------------------------
# Forward wrapper
# ---------------------------------------------------------------------------
def qvalue_forward(x, w1_p, b1_p, w2_p, b2_p, action_dim, *,
                   max_block_batch=2048):
    """x: (B, state_dim); padded params from pad_params().
    Returns (B, action_dim)."""
    B, state_dim = x.shape
    assert w1_p.shape[0] == state_dim, "w1 must be (state_dim, hidden_padded)"
    H_p = w1_p.shape[1]
    A_p = w2_p.shape[1]

    B_p, TB = _pick_batch_tiles(B, max_block_batch)
    n_blocks = B_p // TB

    # Only the batch is padded (to a sublane/tile multiple); K stays un-padded.
    if B_p != B:
        x_p = jnp.zeros((B_p, state_dim), x.dtype).at[:B, :].set(x)
    else:
        x_p = x

    def nbytes(a):
        return a.size * jnp.dtype(a.dtype).itemsize

    cost = pl.CostEstimate(
        flops=2 * B_p * (state_dim * H_p + H_p * A_p),
        transcendentals=0,
        bytes_accessed=(nbytes(x_p) + nbytes(w1_p) + nbytes(b1_p)
                        + nbytes(w2_p) + nbytes(b2_p)
                        + B_p * A_p * jnp.dtype(x.dtype).itemsize),
    )

    out_p = pl.pallas_call(
        qvalue_kernel,
        out_shape=jax.ShapeDtypeStruct((B_p, A_p), x.dtype),
        grid_spec=pltpu.PrefetchScalarGridSpec(
            num_scalar_prefetch=0,
            grid=(n_blocks,),
            in_specs=[
                # x: tiled on batch only; K block == full array dim (no pad).
                pl.BlockSpec((TB, state_dim), lambda i: (i, 0)),
                # Weights/biases: constant index_map -> VMEM-resident.
                pl.BlockSpec((state_dim, H_p), lambda i: (0, 0)),
                pl.BlockSpec((1, H_p), lambda i: (0, 0)),
                pl.BlockSpec((H_p, A_p), lambda i: (0, 0)),
                pl.BlockSpec((1, A_p), lambda i: (0, 0)),
            ],
            # Lane-dense (128-wide) output tile -> unmasked vst.
            out_specs=pl.BlockSpec((TB, A_p), lambda i: (i, 0)),
        ),
        compiler_params=pltpu.CompilerParams(
            # Lets v7x shard the (>=2-step) batch grid over its 2 TensorCores;
            # harmless no-op on single-TC v5e/v6e where n_blocks == 1.
            dimension_semantics=("parallel",)),
        cost_estimate=cost,
    )(x_p, w1_p, b1_p, w2_p, b2_p)

    # Strip batch / action-dim padding.
    return out_p[:B, :action_dim]


# ---------------------------------------------------------------------------
# Parameter init (torch.nn.Linear-style) and pure-JAX reference
# ---------------------------------------------------------------------------
def init_params(key, state_dim, hidden_dim, action_dim, dtype=jnp.float32):
    """U(-1/sqrt(fan_in), 1/sqrt(fan_in)) for weight and bias, like torch.
    Weights stored pre-transposed: (in_features, out_features)."""
    k1, k2, k3, k4 = jax.random.split(key, 4)
    bound1 = 1.0 / float(state_dim) ** 0.5
    bound2 = 1.0 / float(hidden_dim) ** 0.5
    w1 = jax.random.uniform(k1, (state_dim, hidden_dim), dtype, -bound1, bound1)
    b1 = jax.random.uniform(k2, (1, hidden_dim), dtype, -bound1, bound1)
    w2 = jax.random.uniform(k3, (hidden_dim, action_dim), dtype, -bound2, bound2)
    b2 = jax.random.uniform(k4, (1, action_dim), dtype, -bound2, bound2)
    return w1, b1, w2, b2


def _reference(x, w1, b1, w2, b2):
    h = jnp.maximum(x @ w1 + b1, 0.0)
    return h @ w2 + b2


if __name__ == "__main__":
    state_dim, hidden_dim, action_dim = 16, 32, 8
    batch = 4

    key = jax.random.PRNGKey(0)
    kx, kp, kx2 = jax.random.split(key, 3)
    x = jax.random.normal(kx, (batch, state_dim), jnp.float32)
    w1, b1, w2, b2 = init_params(kp, state_dim, hidden_dim, action_dim)

    # One-time parameter padding (hoisted out of the per-step forward path).
    w1_p, b1_p, w2_p, b2_p = pad_params(w1, b1, w2, b2)
    w1_p, b1_p, w2_p, b2_p = jax.block_until_ready((w1_p, b1_p, w2_p, b2_p))

    # Small-shape run (module-consistent demo sizes).
    out = qvalue_forward(x, w1_p, b1_p, w2_p, b2_p, action_dim)
    out = jax.block_until_ready(out)
    ref = _reference(x, w1, b1, w2, b2)
    assert out.shape == (batch, action_dim)
    assert jnp.allclose(out, ref, atol=1e-5, rtol=1e-5)

    # Larger batch to exercise the batch grid / pipelined path.
    xb = jax.random.normal(kx2, (1024, state_dim), jnp.float32)
    outb = jax.block_until_ready(
        qvalue_forward(xb, w1_p, b1_p, w2_p, b2_p, action_dim))
    refb = _reference(xb, w1, b1, w2, b2)
    assert outb.shape == (1024, action_dim)
    assert jnp.allclose(outb, refb, atol=1e-4, rtol=1e-4)

    print("KERNEL_OK")
</pallas_src>

<mosaic_0001>
module attributes {stable_mosaic.version = 11 : i64} {
  func.func @qvalue_kernel(%arg0: i32, %arg1: memref<8x16xf32, #tpu.memory_space<vmem>>, %arg2: memref<16x128xf32, #tpu.memory_space<vmem>>, %arg3: memref<1x128xf32, #tpu.memory_space<vmem>>, %arg4: memref<128x128xf32, #tpu.memory_space<vmem>>, %arg5: memref<1x128xf32, #tpu.memory_space<vmem>>, %arg6: memref<8x128xf32, #tpu.memory_space<vmem>>) attributes {dimension_semantics = [#tpu.dimension_semantics<parallel>], iteration_bounds = array<i64: 1>, scalar_prefetch = 0 : i64, scratch_operands = 0 : i64, tpu.core_type = #tpu.core_type<tc>, window_params = [{transform_indices = @transform_0, window_bounds = array<i64: 8, 16>}, {pipeline_mode = #tpu.pipeline_mode<synchronous>, transform_indices = @transform_1, window_bounds = array<i64: 16, 128>}, {pipeline_mode = #tpu.pipeline_mode<synchronous>, transform_indices = @transform_2, window_bounds = array<i64: 1, 128>}, {pipeline_mode = #tpu.pipeline_mode<synchronous>, transform_indices = @transform_3, window_bounds = array<i64: 128, 128>}, {pipeline_mode = #tpu.pipeline_mode<synchronous>, transform_indices = @transform_4, window_bounds = array<i64: 1, 128>}, {transform_indices = @transform_5, window_bounds = array<i64: 8, 128>}]} {
    %c0 = arith.constant 0 : index
    %c0_0 = arith.constant 0 : index
    %0 = vector.load %arg1[%c0, %c0_0] : memref<8x16xf32, #tpu.memory_space<vmem>>, vector<8x16xf32>
    %c0_1 = arith.constant 0 : index
    %c0_2 = arith.constant 0 : index
    %1 = vector.load %arg2[%c0_1, %c0_2] : memref<16x128xf32, #tpu.memory_space<vmem>>, vector<16x128xf32>
    %cst = arith.constant dense<0.000000e+00> : vector<8x128xf32>
    %2 = tpu.matmul %0, %1, %cst {dimension_numbers = #tpu.dot_dimension_numbers<[1], [0], [0], [1], [0, 0, 1, 1], [], []>} : vector<8x16xf32>, vector<16x128xf32>, vector<8x128xf32> -> vector<8x128xf32>
    %c0_3 = arith.constant 0 : index
    %c0_4 = arith.constant 0 : index
    %3 = vector.load %arg3[%c0_3, %c0_4] : memref<1x128xf32, #tpu.memory_space<vmem>>, vector<1x128xf32>
    %4 = vector.broadcast %3 : vector<1x128xf32> to vector<8x128xf32>
    %5 = arith.addf %2, %4 : vector<8x128xf32>
    %cst_5 = arith.constant 0.000000e+00 : f32
    %6 = vector.broadcast %cst_5 : f32 to vector<8x128xf32>
    %7 = arith.maximumf %5, %6 : vector<8x128xf32>
    %c0_6 = arith.constant 0 : index
    %c0_7 = arith.constant 0 : index
    %8 = vector.load %arg4[%c0_6, %c0_7] : memref<128x128xf32, #tpu.memory_space<vmem>>, vector<128x128xf32>
    %cst_8 = arith.constant dense<0.000000e+00> : vector<8x128xf32>
    %9 = tpu.matmul %7, %8, %cst_8 {dimension_numbers = #tpu.dot_dimension_numbers<[1], [0], [0], [1], [0, 0, 1, 1], [], []>} : vector<8x128xf32>, vector<128x128xf32>, vector<8x128xf32> -> vector<8x128xf32>
    %c0_9 = arith.constant 0 : index
    %c0_10 = arith.constant 0 : index
    %10 = vector.load %arg5[%c0_9, %c0_10] : memref<1x128xf32, #tpu.memory_space<vmem>>, vector<1x128xf32>
    %11 = vector.broadcast %10 : vector<1x128xf32> to vector<8x128xf32>
    %12 = arith.addf %9, %11 : vector<8x128xf32>
    %c0_11 = arith.constant 0 : index
    %c0_12 = arith.constant 0 : index
    %13 = vector.load %arg6[%c0_11, %c0_12] : memref<8x128xf32, #tpu.memory_space<vmem>>, vector<8x128xf32>
    tpu.vector_store %arg6[%c0_11, %c0_12], %12 {strides = array<i32>} : memref<8x128xf32, #tpu.memory_space<vmem>>, vector<8x128xf32>,
    return
  }
  func.func @transform_0(%arg0: i32) -> (i32, i32) {
    %c0_i32 = arith.constant 0 : i32
    %c0_i32_0 = arith.constant 0 : i32
    return %arg0, %c0_i32 : i32, i32
  }
  func.func @transform_1(%arg0: i32) -> (i32, i32) {
    %c0_i32 = arith.constant 0 : i32
    %c0_i32_0 = arith.constant 0 : i32
    %c0_i32_1 = arith.constant 0 : i32
    return %c0_i32, %c0_i32_0 : i32, i32
  }
  func.func @transform_2(%arg0: i32) -> (i32, i32) {
    %c0_i32 = arith.constant 0 : i32
    %c0_i32_0 = arith.constant 0 : i32
    %c0_i32_1 = arith.constant 0 : i32
    return %c0_i32, %c0_i32_0 : i32, i32
  }
  func.func @transform_3(%arg0: i32) -> (i32, i32) {
    %c0_i32 = arith.constant 0 : i32
    %c0_i32_0 = arith.constant 0 : i32
    %c0_i32_1 = arith.constant 0 : i32
    return %c0_i32, %c0_i32_0 : i32, i32
  }
  func.func @transform_4(%arg0: i32) -> (i32, i32) {
    %c0_i32 = arith.constant 0 : i32
    %c0_i32_0 = arith.constant 0 : i32
    %c0_i32_1 = arith.constant 0 : i32
    return %c0_i32, %c0_i32_0 : i32, i32
  }
  func.func @transform_5(%arg0: i32) -> (i32, i32) {
    %c0_i32 = arith.constant 0 : i32
    %c0_i32_0 = arith.constant 0 : i32
    return %arg0, %c0_i32 : i32, i32
  }
}

</mosaic_0001>

<llo_original>
// kernel: tpu_custom_call.1
$region0: #{tpu_custom_call.1}
  #allocation0 [shape = 'u32[]', space=smem, size = 0x4, offset = 0x4, fixed_abs, tag = 'smem constant byte address 0x4 - core index']
  #allocation1 [shape = 'u32[144,128]{1,0:T(1,128)}', space=vmem, size = 0x12000, scoped, tag = 'internal scratch']
  %s0 = inlined_call_operand.hbm [shape: f32[8,16], index: 0, kind: input, shape index: {}]
  %s1 = inlined_call_operand.hbm [shape: f32[16,128], index: 1, kind: input, shape index: {}]
  %s2 = inlined_call_operand.vmem [shape: f32[1,128], index: 2, kind: input, shape index: {}]
  %s3 = inlined_call_operand.hbm [shape: f32[128,128], index: 3, kind: input, shape index: {}]
  %s4 = inlined_call_operand.vmem [shape: f32[1,128], index: 4, kind: input, shape index: {}]
  %s5 = inlined_call_operand.hbm [shape: f32[8,128], index: 5, kind: output, shape index: {}]
  %s6 = sld [smem:[#allocation0]]
  $region42: #{tpu_custom_call.1} parent=0
    _
  %s8 = ssub.s32 1, %s6
  %s9 = scalar_select 0, %s8, %s6
  $region1: #{tpu_custom_call.1} parent=0
    #allocation2 [shape = 'u8[4096]{0}', space=vmem, size = 0x1000, scoped, tag = 'input window, operand 0, single buffered']
    #allocation3 [shape = 's32[1]{0}', space=sflag, size = 0x4, scoped, tag = 'scoped memory for tpu_custom_call.1']
    #allocation4 [shape = 's32[1]{0}', space=sflag, size = 0x4, scoped, tag = 'scoped memory for tpu_custom_call.1']
    #allocation5 [shape = 'u8[8192]{0}', space=vmem, size = 0x2000, scoped, tag = 'input window, operand 1, single buffered']
    #allocation6 [shape = 's32[1]{0}', space=sflag, size = 0x4, scoped, tag = 'scoped memory for tpu_custom_call.1']
    #allocation7 [shape = 'u8[65536]{0}', space=vmem, size = 0x10000, scoped, tag = 'input window, operand 3, single buffered']
    #allocation8 [shape = 'u8[4096]{0}', space=vmem, size = 0x1000, scoped, tag = 'output window, operand 0, single buffered']
    %10 = vsyncpa [#allocation3], 0
    %11 = vsyncpa [#allocation6], 0
    %12 = vsyncpa [#allocation4], 0
    // Predicated region
    $region2: #{tpu_custom_call.1} parent=1 // pred_check
      _
    $region3: #{tpu_custom_call.1} parent=1 // pred_check_branch
      %14 = sbr.rel (0) target = $region5
    $region4: #{tpu_custom_call.1} parent=1 // pred_region
      %s16 = ssub.s32 128, 128
      %17 = vsyncadd [#allocation3], %s16
      %s19 = sshll.u32 [#allocation2], 4
      %s20 = int_to_ptr.vmem [resolvable:$true] %s19
      %22 = dma.hbm_to_vmem [thread:$0]  %s0, 128, %s20, [#allocation3]
    $region5: #{tpu_custom_call.1} parent=1 // pred_fallthru
      _
    // Predicated region
    $region6: #{tpu_custom_call.1} parent=1 // pred_check
      _
    $region7: #{tpu_custom_call.1} parent=1 // pred_check_branch
      %24 = sbr.rel (0) target = $region9
    $region8: #{tpu_custom_call.1} parent=1 // pred_region
      %s26 = ssub.s32 256, 256
      %27 = vsyncadd [#allocation6], %s26
      %s28 = sshll.u32 [#allocation5], 4
      %s29 = int_to_ptr.vmem [resolvable:$true] %s28
      %34 = dma.hbm_to_vmem [thread:$0]  %s1, 256, %s29, [#allocation6], 128, 128, 8
    $region9: #{tpu_custom_call.1} parent=1 // pred_fallthru
      _
    // Predicated region
    $region10: #{tpu_custom_call.1} parent=1 // pred_check
      _
    $region11: #{tpu_custom_call.1} parent=1 // pred_check_branch
      %36 = sbr.rel (0) target = $region13
    $region12: #{tpu_custom_call.1} parent=1 // pred_region
      _
    $region13: #{tpu_custom_call.1} parent=1 // pred_fallthru
      _
    // Predicated region
    $region14: #{tpu_custom_call.1} parent=1 // pred_check
      _
    $region15: #{tpu_custom_call.1} parent=1 // pred_check_branch
      %38 = sbr.rel (0) target = $region17
    $region16: #{tpu_custom_call.1} parent=1 // pred_region
      %s40 = ssub.s32 2048, 2048
      %41 = vsyncadd [#allocation6], %s40
      %s42 = sshll.u32 [#allocation7], 4
      %s43 = int_to_ptr.vmem [resolvable:$true] %s42
      %48 = dma.hbm_to_vmem [thread:$0]  %s3, 2048, %s43, [#allocation6], 128, 128, 8
    $region17: #{tpu_custom_call.1} parent=1 // pred_fallthru
      _
    // Predicated region
    $region18: #{tpu_custom_call.1} parent=1 // pred_check
      _
    $region19: #{tpu_custom_call.1} parent=1 // pred_check_branch
      %50 = sbr.rel (0) target = $region21
    $region20: #{tpu_custom_call.1} parent=1 // pred_region
      _
    $region21: #{tpu_custom_call.1} parent=1 // pred_fallthru
      _
    // Predicated region
    $region22: #{tpu_custom_call.1} parent=1 // pred_check
      _
    $region23: #{tpu_custom_call.1} parent=1 // pred_check_branch
      %52 = sbr.rel (0) target = $region25
    $region24: #{tpu_custom_call.1} parent=1 // pred_region
      %53 = dma.done [#allocation3], 128
    $region25: #{tpu_custom_call.1} parent=1 // pred_fallthru
      _
    // Predicated region
    $region26: #{tpu_custom_call.1} parent=1 // pred_check
      _
    $region27: #{tpu_custom_call.1} parent=1 // pred_check_branch
      %55 = sbr.rel (0) target = $region29
    $region28: #{tpu_custom_call.1} parent=1 // pred_region
      %56 = dma.done [#allocation6], 256
    $region29: #{tpu_custom_call.1} parent=1 // pred_fallthru
      _
    // Predicated region
    $region30: #{tpu_custom_call.1} parent=1 // pred_check
      _
    $region31: #{tpu_custom_call.1} parent=1 // pred_check_branch
      %58 = sbr.rel (0) target = $region33
    $region32: #{tpu_custom_call.1} parent=1 // pred_region
      %59 = dma.done [#allocation6], 2048
    $region33: #{tpu_custom_call.1} parent=1 // pred_fallthru
      _
    %v60 = vld [vmem:[#allocation2] sm:$0xff]
    %v61 = vld [vmem:[#allocation5] sm:$0xff]
    %v62 = vld [vmem:[#allocation5 + $0x8] sm:$0xff]
    %v63 = vld [vmem:[%s2] sm:$0x1]
    %v65 = vlaneseq
    %v66 = vshrl.u32 %v65, 7
    %v67 = vsub.s32 0, %v66
    %v68 = vrot.slane %v63, %v67
    %vm70 = vcmask 130048
    %v72 = vsel %vm70, %v60, 0
    %74 = vmatprep.subr.mxu0 0.0
    %75 = vmatpush1.msra.mxu0 %v61
    %76 = vmatprep.subr.mxu0 0.0
    %77 = vmatpush1.msra.mxu0 %v62
    %78 = vmatprep.subr.mxu0 0.0
    %79 = vmatpush1.msra.mxu0 0.0
    %80 = vmatprep.subr.mxu0 0.0
    %81 = vmatpush1.msra.mxu0 0.0
    %82 = vmatprep.subr.mxu0 0.0
    %83 = vmatpush1.msra.mxu0 0.0
    %84 = vmatprep.subr.mxu0 0.0
    %85 = vmatpush1.msra.mxu0 0.0
    %86 = vmatprep.subr.mxu0 0.0
    %87 = vmatpush1.msra.mxu0 0.0
    %88 = vmatprep.subr.mxu0 0.0
    %89 = vmatpush1.msra.mxu0 0.0
    %90 = vmatprep.subr.mxu0 0.0
    %91 = vmatpush1.msra.mxu0 0.0
    %92 = vmatprep.subr.mxu0 0.0
    %93 = vmatpush1.msra.mxu0 0.0
    %94 = vmatprep.subr.mxu0 0.0
    %95 = vmatpush1.msra.mxu0 0.0
    %96 = vmatprep.subr.mxu0 0.0
    %97 = vmatpush1.msra.mxu0 0.0
    %98 = vmatprep.subr.mxu0 0.0
    %99 = vmatpush1.msra.mxu0 0.0
    %100 = vmatprep.subr.mxu0 0.0
    %101 = vmatpush1.msra.mxu0 0.0
    %102 = vmatprep.subr.mxu0 0.0
    %103 = vmatpush1.msra.mxu0 0.0
    %104 = vmatprep.subr.mxu0 0.0
    %105 = vmatpush1.msra.mxu0 0.0
    %106 = vmatprep.subr.mxu0 0.0
    %107 = vmatpush1.msra.mxu0 0.0
    %108 = vmatprep.subr.mxu0 0.0
    %109 = vmatpush1.msra.mxu0 0.0
    %110 = vmatprep.subr.mxu0 0.0
    %111 = vmatpush1.msra.mxu0 0.0
    %112 = vmatprep.subr.mxu0 0.0
    %113 = vmatpush1.msra.mxu0 0.0
    %114 = vmatprep.subr.mxu0 0.0
    %115 = vmatpush1.msra.mxu0 0.0
    %116 = vmatprep.subr.mxu0 0.0
    %117 = vmatpush1.msra.mxu0 0.0
    %118 = vmatprep.subr.mxu0 0.0
    %119 = vmatpush1.msra.mxu0 0.0
    %120 = vmatprep.subr.mxu0 0.0
    %121 = vmatpush1.msra.mxu0 0.0
    %122 = vmatprep.subr.mxu0 0.0
    %123 = vmatpush1.msra.mxu0 0.0
    %124 = vmatprep.subr.mxu0 0.0
    %125 = vmatpush1.msra.mxu0 0.0
    %126 = vmatprep.subr.mxu0 0.0
    %127 = vmatpush1.msra.mxu0 0.0
    %128 = vmatprep.subr.mxu0 0.0
    %129 = vmatpush1.msra.mxu0 0.0
    %130 = vmatprep.subr.mxu0 0.0
    %131 = vmatpush1.msra.mxu0 0.0
    %132 = vmatprep.subr.mxu0 0.0
    %133 = vmatpush1.msra.mxu0 0.0
    %134 = vmatprep.subr.mxu0 0.0
    %135 = vmatpush1.msra.mxu0 0.0
    %136 = vmatprep.subr.mxu0 0.0
    %137 = vmatpush1.msra.mxu0 0.0
    %138 = vmatprep.mubr.f32.mxu0 0.0
    %139 = vmatmul.mubr.f32.gmra.mrb[0].mxu0 %v72
    %v140 = vpop.f32.mrb[0].mxu0
    %v141 = vadd.f32 %v68, %v140
    %v142 = vpop.f32.mrb[0].mxu0
    %143 = vdwg.mxu0
    %v144 = vmax.f32 %v141, 0.0
    %v145 = vld [vmem:[#allocation7] sm:$0xff]
    %v146 = vld [vmem:[#allocation7 + $0x8] sm:$0xff]
    %v147 = vld [vmem:[#allocation7 + $0x10] sm:$0xff]
    %v148 = vld [vmem:[#allocation7 + $0x18] sm:$0xff]
    %v149 = vld [vmem:[#allocation7 + $0x20] sm:$0xff]
    %v150 = vld [vmem:[#allocation7 + $0x28] sm:$0xff]
    %v151 = vld [vmem:[#allocation7 + $0x30] sm:$0xff]
    %v152 = vld [vmem:[#allocation7 + $0x38] sm:$0xff]
    %v153 = vld [vmem:[#allocation7 + $0x40] sm:$0xff]
    %v154 = vld [vmem:[#allocation7 + $0x48] sm:$0xff]
    %v155 = vld [vmem:[#allocation7 + $0x50] sm:$0xff]
    %v156 = vld [vmem:[#allocation7 + $0x58] sm:$0xff]
    %v157 = vld [vmem:[#allocation7 + $0x60] sm:$0xff]
    %v158 = vld [vmem:[#allocation7 + $0x68] sm:$0xff]
    %v159 = vld [vmem:[#allocation7 + $0x70] sm:$0xff]
    %v160 = vld [vmem:[#allocation7 + $0x78] sm:$0xff]
    %v161 = vld [vmem:[%s4] sm:$0x1]
    %v163 = vlaneseq
    %v164 = vshrl.u32 %v163, 7
    %v165 = vsub.s32 0, %v164
    %v166 = vrot.slane %v161, %v165
    %168 = vmatprep.subr.mxu0 0.0
    %169 = vmatpush1.msra.mxu0 %v145
    %170 = vmatprep.subr.mxu0 0.0
    %171 = vmatpush1.msra.mxu0 %v146
    %172 = vmatprep.subr.mxu0 0.0
    %173 = vmatpush1.msra.mxu0 %v147
    %174 = vmatprep.subr.mxu0 0.0
    %175 = vmatpush1.msra.mxu0 %v148
    %176 = vmatprep.subr.mxu0 0.0
    %177 = vmatpush1.msra.mxu0 %v149
    %178 = vmatprep.subr.mxu0 0.0
    %179 = vmatpush1.msra.mxu0 %v150
    %180 = vmatprep.subr.mxu0 0.0
    %181 = vmatpush1.msra.mxu0 %v151
    %182 = vmatprep.subr.mxu0 0.0
    %183 = vmatpush1.msra.mxu0 %v152
    %184 = vmatprep.subr.mxu0 0.0
    %185 = vmatpush1.msra.mxu0 %v153
    %186 = vmatprep.subr.mxu0 0.0
    %187 = vmatpush1.msra.mxu0 %v154
    %188 = vmatprep.subr.mxu0 0.0
    %189 = vmatpush1.msra.mxu0 %v155
    %190 = vmatprep.subr.mxu0 0.0
    %191 = vmatpush1.msra.mxu0 %v156
    %192 = vmatprep.subr.mxu0 0.0
    %193 = vmatpush1.msra.mxu0 %v157
    %194 = vmatprep.subr.mxu0 0.0
    %195 = vmatpush1.msra.mxu0 %v158
    %196 = vmatprep.subr.mxu0 0.0
    %197 = vmatpush1.msra.mxu0 %v159
    %198 = vmatprep.subr.mxu0 0.0
    %199 = vmatpush1.msra.mxu0 %v160
    %200 = vmatprep.subr.mxu0 0.0
    %201 = vmatpush1.msra.mxu0 0.0
    %202 = vmatprep.subr.mxu0 0.0
    %203 = vmatpush1.msra.mxu0 0.0
    %204 = vmatprep.subr.mxu0 0.0
    %205 = vmatpush1.msra.mxu0 0.0
    %206 = vmatprep.subr.mxu0 0.0
    %207 = vmatpush1.msra.mxu0 0.0
    %208 = vmatprep.subr.mxu0 0.0
    %209 = vmatpush1.msra.mxu0 0.0
    %210 = vmatprep.subr.mxu0 0.0
    %211 = vmatpush1.msra.mxu0 0.0
    %212 = vmatprep.subr.mxu0 0.0
    %213 = vmatpush1.msra.mxu0 0.0
    %214 = vmatprep.subr.mxu0 0.0
    %215 = vmatpush1.msra.mxu0 0.0
    %216 = vmatprep.subr.mxu0 0.0
    %217 = vmatpush1.msra.mxu0 0.0
    %218 = vmatprep.subr.mxu0 0.0
    %219 = vmatpush1.msra.mxu0 0.0
    %220 = vmatprep.subr.mxu0 0.0
    %221 = vmatpush1.msra.mxu0 0.0
    %222 = vmatprep.subr.mxu0 0.0
    %223 = vmatpush1.msra.mxu0 0.0
    %224 = vmatprep.subr.mxu0 0.0
    %225 = vmatpush1.msra.mxu0 0.0
    %226 = vmatprep.subr.mxu0 0.0
    %227 = vmatpush1.msra.mxu0 0.0
    %228 = vmatprep.subr.mxu0 0.0
    %229 = vmatpush1.msra.mxu0 0.0
    %230 = vmatprep.subr.mxu0 0.0
    %231 = vmatpush1.msra.mxu0 0.0
    %232 = vmatprep.mubr.f32.mxu0 0.0
    %233 = vmatmul.mubr.f32.gmra.mrb[0].mxu0 %v144
    %v234 = vpop.f32.mrb[0].mxu0
    %v235 = vadd.f32 %v166, %v234
    %v236 = vpop.f32.mrb[0].mxu0
    %237 = vdwg.mxu0
    %238 = vst [vmem:[#allocation8] sm:$0xff] %v235
    // Predicated region
    $region34: #{tpu_custom_call.1} parent=1 // pred_check
      _
    $region35: #{tpu_custom_call.1} parent=1 // pred_check_branch
      %240 = sbr.rel (0) target = $region37
    $region36: #{tpu_custom_call.1} parent=1 // pred_region
      %s242 = ssub.s32 128, 128
      %243 = vsyncadd [#allocation4], %s242
      %s245 = sshll.u32 [#allocation8], 4
      %s246 = int_to_ptr.vmem [resolvable:$true] %s245
      %248 = dma.vmem_to_hbm [thread:$0]  %s246, 128, %s5, [#allocation4]
    $region37: #{tpu_custom_call.1} parent=1 // pred_fallthru
      _
    // Predicated region
    $region38: #{tpu_custom_call.1} parent=1 // pred_check
      _
    $region39: #{tpu_custom_call.1} parent=1 // pred_check_branch
      %250 = sbr.rel (0) target = $region41
    $region40: #{tpu_custom_call.1} parent=1 // pred_region
      %251 = dma.done [#allocation4], 128
    $region41: #{tpu_custom_call.1} parent=1 // pred_fallthru
      _
    %252 = vsyncpa [#allocation3], 1
    %253 = vsyncpa [#allocation6], 1
    %254 = vsyncpa [#allocation4], 1

</llo_original>
